<compile_context>
chip_gen: v7x
topology: tpu7x:2x2x1
jax: 0.10.0
libtpu: 0.0.40
codegen_flags: <defaults>
</compile_context>

<pallas_src>
import functools

import jax
import jax.numpy as jnp
from jax.experimental import pallas as pl
from jax.experimental.pallas import tpu as pltpu

FEAT = 784          # input features (28*28*1), full last dim of the x block
H1 = 128
H2 = 64
CLS = 10            # real classes
CLS_P = 128         # padded to one lane tile (padded logits get -1e30 bias)


def _round_up(n, m):
    return ((n + m - 1) // m) * m


def _num_tensorcores():
    """Best-effort TensorCore count: 2 on v7x-class chips, else 1."""
    try:
        kind = jax.devices()[0].device_kind.lower()
    except Exception:
        return 1
    return 2 if ("v7" in kind or "tpu7" in kind or "7x" in kind) else 1


def _mlp_kernel(x_ref, w1_ref, b1_ref, w2_ref, b2_ref, w3_ref, b3_ref, o_ref):
    """Full forward for one batch tile: fc1->sigmoid->fc2->sigmoid->fc3->log_softmax."""
    # In-kernel cast to bf16 (MXU-native); x streams from HBM as (TB, 784) f32.
    x = x_ref[...].astype(jnp.bfloat16)                                    # (TB, 784)

    h1 = jnp.dot(x, w1_ref[...], preferred_element_type=jnp.float32)      # (TB, 128)
    h1 = jax.nn.sigmoid(h1 + b1_ref[...]).astype(jnp.bfloat16)

    h2 = jnp.dot(h1, w2_ref[...], preferred_element_type=jnp.float32)     # (TB, 64)
    h2 = jax.nn.sigmoid(h2 + b2_ref[...]).astype(jnp.bfloat16)

    logits = jnp.dot(h2, w3_ref[...], preferred_element_type=jnp.float32)  # (TB, 128)
    logits = logits + b3_ref[...]   # padded cols carry a -1e30 bias -> exp underflows to 0

    # log_softmax over the class dim (dim=1 in PyTorch); padded columns cannot
    # win the max and contribute 0 to the exp-sum, so the 10 real log-probs are
    # identical to the unpadded computation. All softmax math stays f32.
    m = jnp.max(logits, axis=-1, keepdims=True)
    shifted = logits - m
    lse = jnp.log(jnp.sum(jnp.exp(shifted), axis=-1, keepdims=True))
    o_ref[...] = (shifted - lse).astype(o_ref.dtype)


def _pick_batch_tiling(B, batch_tile, num_tc):
    """Tile size (multiple of 8) and padded batch. Only force >=2 steps on 2-TC chips."""
    tb = max(8, (int(batch_tile) // 8) * 8)
    b8 = _round_up(B, 8)
    if b8 <= tb:
        if num_tc >= 2:
            # Split into exactly 2 parallel steps so both TensorCores stay busy.
            tb = max(8, _round_up(b8, 16) // 2)
            return 2 * tb, tb
        # Single TC: the grid is a serial loop -> run as one step, no dummy rows.
        return b8, b8
    return _round_up(b8, tb), tb


def prepare_params(params):
    """One-time weight prep: transpose to (in, out), pad classes to 128, cast bf16."""
    w1, b1, w2, b2, w3, b3 = params
    w1t = w1.T.astype(jnp.bfloat16)                                          # (784, 128)
    w2t = w2.T.astype(jnp.bfloat16)                                          # (128, 64)
    w3t = (jnp.zeros((H2, CLS_P), jnp.float32).at[:, :CLS].set(w3.T)
           .astype(jnp.bfloat16))                                            # (64, 128)
    b1r = b1.reshape(1, H1).astype(jnp.float32)
    b2r = b2.reshape(1, H2).astype(jnp.float32)
    # Padded class columns get a huge negative bias so they drop out of softmax.
    b3r = jnp.full((1, CLS_P), -1e30, jnp.float32).at[0, :CLS].set(b3)
    return (w1t, b1r, w2t, b2r, w3t, b3r)


@functools.partial(jax.jit, static_argnames=("batch_tile",))
def mnist_fc_forward(x_nchw, prepped, *, batch_tile=1024):
    """x_nchw: (B, 1, 28, 28) float32. Returns (B, 10) float32 log-probabilities."""
    w1t, b1r, w2t, b2r, w3t, b3r = prepped
    B = x_nchw.shape[0]
    x2d = x_nchw.reshape(B, -1)                    # row-major, same as torch .view
    assert x2d.shape[1] == FEAT

    Bp, tb = _pick_batch_tiling(B, batch_tile, _num_tensorcores())
    assert tb % 8 == 0 and Bp % tb == 0
    grid = (Bp // tb,)

    # Only the batch rows are padded (zeros); features stay at 784 and the bf16
    # cast happens inside the kernel.
    if Bp != B:
        x2d = jnp.pad(x2d, ((0, Bp - B), (0, 0)))

    cost = pl.CostEstimate(
        flops=2 * Bp * (FEAT * H1 + H1 * H2 + H2 * CLS_P),
        transcendentals=Bp * (H1 + H2 + CLS_P),
        bytes_accessed=x2d.size * 4
        + (w1t.size + w2t.size + w3t.size) * 2
        + (b1r.size + b2r.size + b3r.size) * 4
        + Bp * CLS_P * 4,
    )

    out_padded = pl.pallas_call(
        _mlp_kernel,
        out_shape=jax.ShapeDtypeStruct((Bp, CLS_P), jnp.float32),
        grid_spec=pltpu.PrefetchScalarGridSpec(
            num_scalar_prefetch=0,
            grid=grid,
            in_specs=[
                pl.BlockSpec((tb, FEAT), lambda i: (i, 0)),     # x tile (streams, f32)
                pl.BlockSpec((FEAT, H1), lambda i: (0, 0)),     # W1^T  (VMEM-resident)
                pl.BlockSpec((1, H1), lambda i: (0, 0)),        # b1
                pl.BlockSpec((H1, H2), lambda i: (0, 0)),       # W2^T
                pl.BlockSpec((1, H2), lambda i: (0, 0)),        # b2
                pl.BlockSpec((H2, CLS_P), lambda i: (0, 0)),    # W3^T (class-padded)
                pl.BlockSpec((1, CLS_P), lambda i: (0, 0)),     # b3 (padded, -1e30)
            ],
            out_specs=pl.BlockSpec((tb, CLS_P), lambda i: (i, 0)),
        ),
        compiler_params=pltpu.CompilerParams(
            dimension_semantics=("parallel",),
            vmem_limit_bytes=32 * 1024 * 1024,
        ),
        cost_estimate=cost,
    )(x2d, w1t, b1r, w2t, b2r, w3t, b3r)

    return out_padded[:B, :CLS]


def init_params(key):
    """Deterministic init mimicking nn.Linear default (uniform +-1/sqrt(fan_in))."""
    def linear(k, out_f, in_f):
        kw, kb = jax.random.split(k)
        bound = 1.0 / jnp.sqrt(in_f)
        w = jax.random.uniform(kw, (out_f, in_f), jnp.float32, -bound, bound)
        b = jax.random.uniform(kb, (out_f,), jnp.float32, -bound, bound)
        return w, b

    k1, k2, k3 = jax.random.split(key, 3)
    w1, b1 = linear(k1, H1, FEAT)
    w2, b2 = linear(k2, H2, H1)
    w3, b3 = linear(k3, CLS, H2)
    return (w1, b1, w2, b2, w3, b3)


def _reference_forward(x_nchw, params):
    """Pure-JAX f32 reference (exact PyTorch semantics)."""
    w1, b1, w2, b2, w3, b3 = params
    x = x_nchw.reshape(x_nchw.shape[0], -1)
    h1 = jax.nn.sigmoid(x @ w1.T + b1)
    h2 = jax.nn.sigmoid(h1 @ w2.T + b2)
    return jax.nn.log_softmax(h2 @ w3.T + b3, axis=1)


def _reference_forward_bf16(x_nchw, params):
    """Reference with the same bf16 input/weight/activation casts as the kernel."""
    w1, b1, w2, b2, w3, b3 = params
    bf = lambda a: a.astype(jnp.bfloat16).astype(jnp.float32)
    x = bf(x_nchw.reshape(x_nchw.shape[0], -1))
    h1 = bf(jax.nn.sigmoid(x @ bf(w1.T) + b1))
    h2 = bf(jax.nn.sigmoid(h1 @ bf(w2.T) + b2))
    return jax.nn.log_softmax(h2 @ bf(w3.T) + b3, axis=1)


if __name__ == "__main__":
    key = jax.random.PRNGKey(0)
    k_params, k_x = jax.random.split(key)

    params = init_params(k_params)
    prepped = prepare_params(params)   # weight prep hoisted: done once, reused per call

    # Small MNIST-like batch: (B=8, C=1, H=28, W=28). 784 features fixed by fc1.
    x = jax.random.uniform(k_x, (8, 1, 28, 28), jnp.float32)

    out = jax.block_until_ready(mnist_fc_forward(x, prepped))
    assert out.shape == (8, 10)

    # Tight check vs. a reference that applies the same bf16 casts.
    ref_bf16 = _reference_forward_bf16(x, params)
    assert jnp.allclose(out, ref_bf16, atol=5e-3, rtol=5e-3), "mismatch vs bf16 reference"

    # Loose sanity check vs. the full-f32 PyTorch-semantics reference.
    ref_f32 = _reference_forward(x, params)
    assert jnp.allclose(out, ref_f32, atol=5e-2, rtol=5e-2), "mismatch vs f32 reference"

    print("KERNEL_OK")
</pallas_src>

<mosaic_0001>
module attributes {stable_mosaic.version = 11 : i64} {
  func.func @_mlp_kernel(%arg0: i32, %arg1: memref<8x784xf32, #tpu.memory_space<vmem>>, %arg2: memref<784x128xbf16, #tpu.memory_space<vmem>>, %arg3: memref<1x128xf32, #tpu.memory_space<vmem>>, %arg4: memref<128x64xbf16, #tpu.memory_space<vmem>>, %arg5: memref<1x64xf32, #tpu.memory_space<vmem>>, %arg6: memref<64x128xbf16, #tpu.memory_space<vmem>>, %arg7: memref<1x128xf32, #tpu.memory_space<vmem>>, %arg8: memref<8x128xf32, #tpu.memory_space<vmem>>) attributes {dimension_semantics = [#tpu.dimension_semantics<parallel>], iteration_bounds = array<i64: 1>, scalar_prefetch = 0 : i64, scratch_operands = 0 : i64, tpu.core_type = #tpu.core_type<tc>, window_params = [{transform_indices = @transform_0, window_bounds = array<i64: 8, 784>}, {pipeline_mode = #tpu.pipeline_mode<synchronous>, transform_indices = @transform_1, window_bounds = array<i64: 784, 128>}, {pipeline_mode = #tpu.pipeline_mode<synchronous>, transform_indices = @transform_2, window_bounds = array<i64: 1, 128>}, {pipeline_mode = #tpu.pipeline_mode<synchronous>, transform_indices = @transform_3, window_bounds = array<i64: 128, 64>}, {pipeline_mode = #tpu.pipeline_mode<synchronous>, transform_indices = @transform_4, window_bounds = array<i64: 1, 64>}, {pipeline_mode = #tpu.pipeline_mode<synchronous>, transform_indices = @transform_5, window_bounds = array<i64: 64, 128>}, {pipeline_mode = #tpu.pipeline_mode<synchronous>, transform_indices = @transform_6, window_bounds = array<i64: 1, 128>}, {transform_indices = @transform_7, window_bounds = array<i64: 8, 128>}]} {
    %c0 = arith.constant 0 : index
    %c0_0 = arith.constant 0 : index
    %0 = vector.load %arg1[%c0, %c0_0] : memref<8x784xf32, #tpu.memory_space<vmem>>, vector<8x784xf32>
    %1 = arith.truncf %0 : vector<8x784xf32> to vector<8x784xbf16>
    %c0_1 = arith.constant 0 : index
    %c0_2 = arith.constant 0 : index
    %2 = vector.load %arg2[%c0_1, %c0_2] : memref<784x128xbf16, #tpu.memory_space<vmem>>, vector<784x128xbf16>
    %cst = arith.constant dense<0.000000e+00> : vector<8x128xf32>
    %3 = tpu.matmul %1, %2, %cst {dimension_numbers = #tpu.dot_dimension_numbers<[1], [0], [0], [1], [0, 0, 1, 1], [], []>} : vector<8x784xbf16>, vector<784x128xbf16>, vector<8x128xf32> -> vector<8x128xf32>
    %c0_3 = arith.constant 0 : index
    %c0_4 = arith.constant 0 : index
    %4 = vector.load %arg3[%c0_3, %c0_4] : memref<1x128xf32, #tpu.memory_space<vmem>>, vector<1x128xf32>
    %5 = vector.broadcast %4 : vector<1x128xf32> to vector<8x128xf32>
    %6 = arith.addf %3, %5 : vector<8x128xf32>
    %7 = arith.negf %6 : vector<8x128xf32>
    %8 = math.exp %7 : vector<8x128xf32>
    %cst_5 = arith.constant 1.000000e+00 : f32
    %9 = vector.broadcast %cst_5 : f32 to vector<8x128xf32>
    %10 = arith.addf %9, %8 : vector<8x128xf32>
    %11 = arith.divf %9, %10 : vector<8x128xf32>
    %12 = arith.truncf %11 : vector<8x128xf32> to vector<8x128xbf16>
    %c0_6 = arith.constant 0 : index
    %c0_7 = arith.constant 0 : index
    %13 = vector.load %arg4[%c0_6, %c0_7] : memref<128x64xbf16, #tpu.memory_space<vmem>>, vector<128x64xbf16>
    %cst_8 = arith.constant dense<0.000000e+00> : vector<8x64xf32>
    %14 = tpu.matmul %12, %13, %cst_8 {dimension_numbers = #tpu.dot_dimension_numbers<[1], [0], [0], [1], [0, 0, 1, 1], [], []>} : vector<8x128xbf16>, vector<128x64xbf16>, vector<8x64xf32> -> vector<8x64xf32>
    %c0_9 = arith.constant 0 : index
    %c0_10 = arith.constant 0 : index
    %15 = vector.load %arg5[%c0_9, %c0_10] : memref<1x64xf32, #tpu.memory_space<vmem>>, vector<1x64xf32>
    %16 = vector.broadcast %15 : vector<1x64xf32> to vector<8x64xf32>
    %17 = arith.addf %14, %16 : vector<8x64xf32>
    %18 = arith.negf %17 : vector<8x64xf32>
    %19 = math.exp %18 : vector<8x64xf32>
    %cst_11 = arith.constant 1.000000e+00 : f32
    %20 = vector.broadcast %cst_11 : f32 to vector<8x64xf32>
    %21 = arith.addf %20, %19 : vector<8x64xf32>
    %22 = arith.divf %20, %21 : vector<8x64xf32>
    %23 = arith.truncf %22 : vector<8x64xf32> to vector<8x64xbf16>
    %c0_12 = arith.constant 0 : index
    %c0_13 = arith.constant 0 : index
    %24 = vector.load %arg6[%c0_12, %c0_13] : memref<64x128xbf16, #tpu.memory_space<vmem>>, vector<64x128xbf16>
    %cst_14 = arith.constant dense<0.000000e+00> : vector<8x128xf32>
    %25 = tpu.matmul %23, %24, %cst_14 {dimension_numbers = #tpu.dot_dimension_numbers<[1], [0], [0], [1], [0, 0, 1, 1], [], []>} : vector<8x64xbf16>, vector<64x128xbf16>, vector<8x128xf32> -> vector<8x128xf32>
    %c0_15 = arith.constant 0 : index
    %c0_16 = arith.constant 0 : index
    %26 = vector.load %arg7[%c0_15, %c0_16] : memref<1x128xf32, #tpu.memory_space<vmem>>, vector<1x128xf32>
    %27 = vector.broadcast %26 : vector<1x128xf32> to vector<8x128xf32>
    %28 = arith.addf %25, %27 : vector<8x128xf32>
    %cst_17 = arith.constant dense<0xFF800000> : vector<8xf32>
    %29 = vector.multi_reduction <maximumf>, %28, %cst_17 [1] : vector<8x128xf32> to vector<8xf32>
    %30 = vector.shape_cast %29 : vector<8xf32> to vector<8x1xf32>
    %31 = vector.broadcast %30 : vector<8x1xf32> to vector<8x128xf32>
    %32 = arith.subf %28, %31 : vector<8x128xf32>
    %33 = math.exp %32 : vector<8x128xf32>
    %cst_18 = arith.constant dense<0.000000e+00> : vector<8xf32>
    %34 = vector.multi_reduction <add>, %33, %cst_18 [1] : vector<8x128xf32> to vector<8xf32>
    %35 = vector.shape_cast %34 : vector<8xf32> to vector<8x1xf32>
    %36 = math.log %35 : vector<8x1xf32>
    %37 = vector.broadcast %36 : vector<8x1xf32> to vector<8x128xf32>
    %38 = arith.subf %32, %37 : vector<8x128xf32>
    %c0_19 = arith.constant 0 : index
    %c0_20 = arith.constant 0 : index
    %39 = vector.load %arg8[%c0_19, %c0_20] : memref<8x128xf32, #tpu.memory_space<vmem>>, vector<8x128xf32>
    tpu.vector_store %arg8[%c0_19, %c0_20], %38 {strides = array<i32>} : memref<8x128xf32, #tpu.memory_space<vmem>>, vector<8x128xf32>,
    return
  }
  func.func @transform_0(%arg0: i32) -> (i32, i32) {
    %c0_i32 = arith.constant 0 : i32
    %c0_i32_0 = arith.constant 0 : i32
    return %arg0, %c0_i32 : i32, i32
  }
  func.func @transform_1(%arg0: i32) -> (i32, i32) {
    %c0_i32 = arith.constant 0 : i32
    %c0_i32_0 = arith.constant 0 : i32
    %c0_i32_1 = arith.constant 0 : i32
    return %c0_i32, %c0_i32_0 : i32, i32
  }
  func.func @transform_2(%arg0: i32) -> (i32, i32) {
    %c0_i32 = arith.constant 0 : i32
    %c0_i32_0 = arith.constant 0 : i32
    %c0_i32_1 = arith.constant 0 : i32
    return %c0_i32, %c0_i32_0 : i32, i32
  }
  func.func @transform_3(%arg0: i32) -> (i32, i32) {
    %c0_i32 = arith.constant 0 : i32
    %c0_i32_0 = arith.constant 0 : i32
    %c0_i32_1 = arith.constant 0 : i32
    return %c0_i32, %c0_i32_0 : i32, i32
  }
  func.func @transform_4(%arg0: i32) -> (i32, i32) {
    %c0_i32 = arith.constant 0 : i32
    %c0_i32_0 = arith.constant 0 : i32
    %c0_i32_1 = arith.constant 0 : i32
    return %c0_i32, %c0_i32_0 : i32, i32
  }
  func.func @transform_5(%arg0: i32) -> (i32, i32) {
    %c0_i32 = arith.constant 0 : i32
    %c0_i32_0 = arith.constant 0 : i32
    %c0_i32_1 = arith.constant 0 : i32
    return %c0_i32, %c0_i32_0 : i32, i32
  }
  func.func @transform_6(%arg0: i32) -> (i32, i32) {
    %c0_i32 = arith.constant 0 : i32
    %c0_i32_0 = arith.constant 0 : i32
    %c0_i32_1 = arith.constant 0 : i32
    return %c0_i32, %c0_i32_0 : i32, i32
  }
  func.func @transform_7(%arg0: i32) -> (i32, i32) {
    %c0_i32 = arith.constant 0 : i32
    %c0_i32_0 = arith.constant 0 : i32
    return %arg0, %c0_i32 : i32, i32
  }
}

</mosaic_0001>

<llo_original>
// kernel: mnist_fc_forward.1
$region0: #{mnist_fc_forward.1}
  #allocation0 [shape = 'u32[]', space=smem, size = 0x4, offset = 0x4, fixed_abs, tag = 'smem constant byte address 0x4 - core index']
  #allocation1 [shape = 'u32[144,128]{1,0:T(1,128)}', space=vmem, size = 0x12000, scoped, tag = 'internal scratch']
  %s0 = inlined_call_operand.vmem [shape: f32[8,784], index: 0, kind: input, shape index: {}]
  %s1 = inlined_call_operand.vmem [shape: bf16[784,128], index: 1, kind: input, shape index: {}]
  %s2 = inlined_call_operand.vmem [shape: f32[1,128], index: 2, kind: input, shape index: {}]
  %s3 = inlined_call_operand.vmem [shape: bf16[128,64], index: 3, kind: input, shape index: {}]
  %s4 = inlined_call_operand.vmem [shape: f32[1,64], index: 4, kind: input, shape index: {}]
  %s5 = inlined_call_operand.vmem [shape: bf16[64,128], index: 5, kind: input, shape index: {}]
  %s6 = inlined_call_operand.vmem [shape: f32[1,128], index: 6, kind: input, shape index: {}]
  %s7 = inlined_call_operand.hbm [shape: f32[8,128], index: 7, kind: output, shape index: {}]
  %s8 = sld [smem:[#allocation0]]
  $region38: #{mnist_fc_forward.1} parent=0
    _
  %s10 = ssub.s32 1, %s8
  %s11 = scalar_select 0, %s10, %s8
  $region1: #{mnist_fc_forward.1} parent=0
    #allocation2 [shape = 'u8[4096]{0}', space=vmem, size = 0x1000, scoped, tag = 'output window, operand 0, single buffered']
    #allocation3 [shape = 's32[1]{0}', space=sflag, size = 0x4, scoped, tag = 'scoped memory for mnist_fc_forward.1']
    %12 = vsyncpa [#allocation3], 0
    // Predicated region
    $region2: #{mnist_fc_forward.1} parent=1 // pred_check
      _
    $region3: #{mnist_fc_forward.1} parent=1 // pred_check_branch
      %14 = sbr.rel (0) target = $region5
    $region4: #{mnist_fc_forward.1} parent=1 // pred_region
      _
    $region5: #{mnist_fc_forward.1} parent=1 // pred_fallthru
      _
    // Predicated region
    $region6: #{mnist_fc_forward.1} parent=1 // pred_check
      _
    $region7: #{mnist_fc_forward.1} parent=1 // pred_check_branch
      %16 = sbr.rel (0) target = $region9
    $region8: #{mnist_fc_forward.1} parent=1 // pred_region
      _
    $region9: #{mnist_fc_forward.1} parent=1 // pred_fallthru
      _
    // Predicated region
    $region10: #{mnist_fc_forward.1} parent=1 // pred_check
      _
    $region11: #{mnist_fc_forward.1} parent=1 // pred_check_branch
      %18 = sbr.rel (0) target = $region13
    $region12: #{mnist_fc_forward.1} parent=1 // pred_region
      _
    $region13: #{mnist_fc_forward.1} parent=1 // pred_fallthru
      _
    // Predicated region
    $region14: #{mnist_fc_forward.1} parent=1 // pred_check
      _
    $region15: #{mnist_fc_forward.1} parent=1 // pred_check_branch
      %20 = sbr.rel (0) target = $region17
    $region16: #{mnist_fc_forward.1} parent=1 // pred_region
      _
    $region17: #{mnist_fc_forward.1} parent=1 // pred_fallthru
      _
    // Predicated region
    $region18: #{mnist_fc_forward.1} parent=1 // pred_check
      _
    $region19: #{mnist_fc_forward.1} parent=1 // pred_check_branch
      %22 = sbr.rel (0) target = $region21
    $region20: #{mnist_fc_forward.1} parent=1 // pred_region
      _
    $region21: #{mnist_fc_forward.1} parent=1 // pred_fallthru
      _
    // Predicated region
    $region22: #{mnist_fc_forward.1} parent=1 // pred_check
      _
    $region23: #{mnist_fc_forward.1} parent=1 // pred_check_branch
      %24 = sbr.rel (0) target = $region25
    $region24: #{mnist_fc_forward.1} parent=1 // pred_region
      _
    $region25: #{mnist_fc_forward.1} parent=1 // pred_fallthru
      _
    // Predicated region
    $region26: #{mnist_fc_forward.1} parent=1 // pred_check
      _
    $region27: #{mnist_fc_forward.1} parent=1 // pred_check_branch
      %26 = sbr.rel (0) target = $region29
    $region28: #{mnist_fc_forward.1} parent=1 // pred_region
      _
    $region29: #{mnist_fc_forward.1} parent=1 // pred_fallthru
      _
    %v28 = vld [vmem:[%s0] sm:$0xff]
    %v29 = vld [vmem:[%s0 + $0x8] sm:$0xff]
    %v30 = vld [vmem:[%s0 + $0x10] sm:$0xff]
    %v31 = vld [vmem:[%s0 + $0x18] sm:$0xff]
    %v32 = vld [vmem:[%s0 + $0x20] sm:$0xff]
    %v33 = vld [vmem:[%s0 + $0x28] sm:$0xff]
    %v34 = vld [vmem:[%s0 + $0x30] sm:$0xff]
    %v35 = vpack.c.bf16 %v28, %v28
    %v36 = vpack.c.bf16 %v29, %v29
    %v37 = vpack.c.bf16 %v30, %v30
    %v38 = vpack.c.bf16 %v31, %v31
    %v39 = vpack.c.bf16 %v32, %v32
    %v40 = vpack.c.bf16 %v33, %v33
    %v41 = vpack.c.bf16 %v34, %v34
    %v42 = vld [vmem:[%s1] sm:$0xf]
    %v43 = vld [vmem:[%s1 + $0x4] sm:$0xf]
    %v44 = vld [vmem:[%s1 + $0x8] sm:$0xf]
    %v45 = vld [vmem:[%s1 + $0xc] sm:$0xf]
    %v46 = vld [vmem:[%s1 + $0x10] sm:$0xf]
    %v47 = vld [vmem:[%s1 + $0x14] sm:$0xf]
    %v48 = vld [vmem:[%s1 + $0x18] sm:$0xf]
    %v49 = vld [vmem:[%s1 + $0x1c] sm:$0xf]
    %v50 = vld [vmem:[%s1 + $0x20] sm:$0xf]
    %v51 = vld [vmem:[%s1 + $0x24] sm:$0xf]
    %v52 = vld [vmem:[%s1 + $0x28] sm:$0xf]
    %v53 = vld [vmem:[%s1 + $0x2c] sm:$0xf]
    %v54 = vld [vmem:[%s1 + $0x30] sm:$0xf]
    %v55 = vld [vmem:[%s1 + $0x34] sm:$0xf]
    %v56 = vld [vmem:[%s1 + $0x38] sm:$0xf]
    %v57 = vld [vmem:[%s1 + $0x3c] sm:$0xf]
    %v58 = vld [vmem:[%s1 + $0x40] sm:$0xf]
    %v59 = vld [vmem:[%s1 + $0x44] sm:$0xf]
    %v60 = vld [vmem:[%s1 + $0x48] sm:$0xf]
    %v61 = vld [vmem:[%s1 + $0x4c] sm:$0xf]
    %v62 = vld [vmem:[%s1 + $0x50] sm:$0xf]
    %v63 = vld [vmem:[%s1 + $0x54] sm:$0xf]
    %v64 = vld [vmem:[%s1 + $0x58] sm:$0xf]
    %v65 = vld [vmem:[%s1 + $0x5c] sm:$0xf]
    %v66 = vld [vmem:[%s1 + $0x60] sm:$0xf]
    %v67 = vld [vmem:[%s1 + $0x64] sm:$0xf]
    %v68 = vld [vmem:[%s1 + $0x68] sm:$0xf]
    %v69 = vld [vmem:[%s1 + $0x6c] sm:$0xf]
    %v70 = vld [vmem:[%s1 + $0x70] sm:$0xf]
    %v71 = vld [vmem:[%s1 + $0x74] sm:$0xf]
    %v72 = vld [vmem:[%s1 + $0x78] sm:$0xf]
    %v73 = vld [vmem:[%s1 + $0x7c] sm:$0xf]
    %v74 = vld [vmem:[%s1 + $0x80] sm:$0xf]
    %v75 = vld [vmem:[%s1 + $0x84] sm:$0xf]
    %v76 = vld [vmem:[%s1 + $0x88] sm:$0xf]
    %v77 = vld [vmem:[%s1 + $0x8c] sm:$0xf]
    %v78 = vld [vmem:[%s1 + $0x90] sm:$0xf]
    %v79 = vld [vmem:[%s1 + $0x94] sm:$0xf]
    %v80 = vld [vmem:[%s1 + $0x98] sm:$0xf]
    %v81 = vld [vmem:[%s1 + $0x9c] sm:$0xf]
    %v82 = vld [vmem:[%s1 + $0xa0] sm:$0xf]
    %v83 = vld [vmem:[%s1 + $0xa4] sm:$0xf]
    %v84 = vld [vmem:[%s1 + $0xa8] sm:$0xf]
    %v85 = vld [vmem:[%s1 + $0xac] sm:$0xf]
    %v86 = vld [vmem:[%s1 + $0xb0] sm:$0xf]
    %v87 = vld [vmem:[%s1 + $0xb4] sm:$0xf]
    %v88 = vld [vmem:[%s1 + $0xb8] sm:$0xf]
    %v89 = vld [vmem:[%s1 + $0xbc] sm:$0xf]
    %v90 = vld [vmem:[%s1 + $0xc0] sm:$0xf]
    %v91 = vld [vmem:[%s1 + $0xc4] sm:$0xf]
    %v92 = vld [vmem:[%s1 + $0xc8] sm:$0xf]
    %v93 = vld [vmem:[%s1 + $0xcc] sm:$0xf]
    %v94 = vld [vmem:[%s1 + $0xd0] sm:$0xf]
    %v95 = vld [vmem:[%s1 + $0xd4] sm:$0xf]
    %v96 = vld [vmem:[%s1 + $0xd8] sm:$0xf]
    %v97 = vld [vmem:[%s1 + $0xdc] sm:$0xf]
    %v98 = vld [vmem:[%s1 + $0xe0] sm:$0xf]
    %v99 = vld [vmem:[%s1 + $0xe4] sm:$0xf]
    %v100 = vld [vmem:[%s1 + $0xe8] sm:$0xf]
    %v101 = vld [vmem:[%s1 + $0xec] sm:$0xf]
    %v102 = vld [vmem:[%s1 + $0xf0] sm:$0xf]
    %v103 = vld [vmem:[%s1 + $0xf4] sm:$0xf]
    %v104 = vld [vmem:[%s1 + $0xf8] sm:$0xf]
    %v105 = vld [vmem:[%s1 + $0xfc] sm:$0xf]
    %v106 = vld [vmem:[%s1 + $0x100] sm:$0xf]
    %v107 = vld [vmem:[%s1 + $0x104] sm:$0xf]
    %v108 = vld [vmem:[%s1 + $0x108] sm:$0xf]
    %v109 = vld [vmem:[%s1 + $0x10c] sm:$0xf]
    %v110 = vld [vmem:[%s1 + $0x110] sm:$0xf]
    %v111 = vld [vmem:[%s1 + $0x114] sm:$0xf]
    %v112 = vld [vmem:[%s1 + $0x118] sm:$0xf]
    %v113 = vld [vmem:[%s1 + $0x11c] sm:$0xf]
    %v114 = vld [vmem:[%s1 + $0x120] sm:$0xf]
    %v115 = vld [vmem:[%s1 + $0x124] sm:$0xf]
    %v116 = vld [vmem:[%s1 + $0x128] sm:$0xf]
    %v117 = vld [vmem:[%s1 + $0x12c] sm:$0xf]
    %v118 = vld [vmem:[%s1 + $0x130] sm:$0xf]
    %v119 = vld [vmem:[%s1 + $0x134] sm:$0xf]
    %v120 = vld [vmem:[%s1 + $0x138] sm:$0xf]
    %v121 = vld [vmem:[%s1 + $0x13c] sm:$0xf]
    %v122 = vld [vmem:[%s1 + $0x140] sm:$0xf]
    %v123 = vld [vmem:[%s1 + $0x144] sm:$0xf]
    %v124 = vld [vmem:[%s1 + $0x148] sm:$0xf]
    %v125 = vld [vmem:[%s1 + $0x14c] sm:$0xf]
    %v126 = vld [vmem:[%s1 + $0x150] sm:$0xf]
    %v127 = vld [vmem:[%s1 + $0x154] sm:$0xf]
    %v128 = vld [vmem:[%s1 + $0x158] sm:$0xf]
    %v129 = vld [vmem:[%s1 + $0x15c] sm:$0xf]
    %v130 = vld [vmem:[%s1 + $0x160] sm:$0xf]
    %v131 = vld [vmem:[%s1 + $0x164] sm:$0xf]
    %v132 = vld [vmem:[%s1 + $0x168] sm:$0xf]
    %v133 = vld [vmem:[%s1 + $0x16c] sm:$0xf]
    %v134 = vld [vmem:[%s1 + $0x170] sm:$0xf]
    %v135 = vld [vmem:[%s1 + $0x174] sm:$0xf]
    %v136 = vld [vmem:[%s1 + $0x178] sm:$0xf]
    %v137 = vld [vmem:[%s1 + $0x17c] sm:$0xf]
    %v138 = vld [vmem:[%s1 + $0x180] sm:$0xf]
    %v139 = vld [vmem:[%s1 + $0x184] sm:$0xf]
    %v140 = vld [vmem:[%s2] sm:$0x1]
    %v142 = vlaneseq
    %v143 = vshrl.u32 %v142, 7
    %v144 = vsub.s32 0, %v143
    %v145 = vrot.slane %v140, %v144
    %v245 = vunpack.c.l.b16 %v42
    %v246 = vunpack.c.l.b16 %v43
    %v247 = vunpack.c.l.b16 %v44
    %v248 = vunpack.c.l.b16 %v45
    %v249 = vunpack.c.l.b16 %v46
    %v250 = vunpack.c.l.b16 %v47
    %v251 = vunpack.c.l.b16 %v48
    %v252 = vunpack.c.l.b16 %v49
    %v253 = vunpack.c.l.b16 %v50
    %v254 = vunpack.c.l.b16 %v51
    %v255 = vunpack.c.l.b16 %v52
    %v256 = vunpack.c.l.b16 %v53
    %v257 = vunpack.c.l.b16 %v54
    %v258 = vunpack.c.l.b16 %v55
    %v259 = vunpack.c.l.b16 %v56
    %v260 = vunpack.c.l.b16 %v57
    %v261 = vunpack.c.l.b16 %v58
    %v262 = vunpack.c.l.b16 %v59
    %v263 = vunpack.c.l.b16 %v60
    %v264 = vunpack.c.l.b16 %v61
    %v265 = vunpack.c.l.b16 %v62
    %v266 = vunpack.c.l.b16 %v63
    %v267 = vunpack.c.l.b16 %v64
    %v268 = vunpack.c.l.b16 %v65
    %v269 = vunpack.c.l.b16 %v66
    %v270 = vunpack.c.l.b16 %v67
    %v271 = vunpack.c.l.b16 %v68
    %v272 = vunpack.c.l.b16 %v69
    %v273 = vunpack.c.l.b16 %v70
    %v274 = vunpack.c.l.b16 %v71
    %v275 = vunpack.c.l.b16 %v72
    %v276 = vunpack.c.l.b16 %v73
    %v277 = vunpack.c.l.b16 %v74
    %v278 = vunpack.c.l.b16 %v75
    %v279 = vunpack.c.l.b16 %v76
    %v280 = vunpack.c.l.b16 %v77
    %v281 = vunpack.c.l.b16 %v78
    %v282 = vunpack.c.l.b16 %v79
    %v283 = vunpack.c.l.b16 %v80
    %v284 = vunpack.c.l.b16 %v81
    %v285 = vunpack.c.l.b16 %v82
    %v286 = vunpack.c.l.b16 %v83
    %v287 = vunpack.c.l.b16 %v84
    %v288 = vunpack.c.l.b16 %v85
    %v289 = vunpack.c.l.b16 %v86
    %v290 = vunpack.c.l.b16 %v87
    %v291 = vunpack.c.l.b16 %v88
    %v292 = vunpack.c.l.b16 %v89
    %v293 = vunpack.c.l.b16 %v90
    %v294 = vunpack.c.l.b16 %v91
    %v295 = vunpack.c.l.b16 %v92
    %v296 = vunpack.c.l.b16 %v93
    %v297 = vunpack.c.l.b16 %v94
    %v298 = vunpack.c.l.b16 %v95
    %v299 = vunpack.c.l.b16 %v96
    %v300 = vunpack.c.l.b16 %v97
    %v301 = vunpack.c.l.b16 %v98
    %v302 = vunpack.c.l.b16 %v99
    %v303 = vunpack.c.l.b16 %v100
    %v304 = vunpack.c.l.b16 %v101
    %v305 = vunpack.c.l.b16 %v102
    %v306 = vunpack.c.l.b16 %v103
    %v307 = vunpack.c.l.b16 %v104
    %v308 = vunpack.c.l.b16 %v105
    %v309 = vunpack.c.l.b16 %v106
    %v310 = vunpack.c.l.b16 %v107
    %v311 = vunpack.c.l.b16 %v108
    %v312 = vunpack.c.l.b16 %v109
    %v313 = vunpack.c.l.b16 %v110
    %v314 = vunpack.c.l.b16 %v111
    %v315 = vunpack.c.l.b16 %v112
    %v316 = vunpack.c.l.b16 %v113
    %v317 = vunpack.c.l.b16 %v114
    %v318 = vunpack.c.l.b16 %v115
    %v319 = vunpack.c.l.b16 %v116
    %v320 = vunpack.c.l.b16 %v117
    %v321 = vunpack.c.l.b16 %v118
    %v322 = vunpack.c.l.b16 %v119
    %v323 = vunpack.c.l.b16 %v120
    %v324 = vunpack.c.l.b16 %v121
    %v325 = vunpack.c.l.b16 %v122
    %v326 = vunpack.c.l.b16 %v123
    %v327 = vunpack.c.l.b16 %v124
    %v328 = vunpack.c.l.b16 %v125
    %v329 = vunpack.c.l.b16 %v126
    %v330 = vunpack.c.l.b16 %v127
    %v331 = vunpack.c.l.b16 %v128
    %v332 = vunpack.c.l.b16 %v129
    %v333 = vunpack.c.l.b16 %v130
    %v334 = vunpack.c.l.b16 %v131
    %v335 = vunpack.c.l.b16 %v132
    %v336 = vunpack.c.l.b16 %v133
    %v337 = vunpack.c.l.b16 %v134
    %v338 = vunpack.c.l.b16 %v135
    %v339 = vunpack.c.l.b16 %v136
    %v340 = vunpack.c.l.b16 %v137
    %v341 = vunpack.c.l.b16 %v138
    %v342 = vunpack.c.l.b16 %v139
    %v343 = vpack.c.b16 %v246, %v245
    %v344 = vpack.c.b16 %v248, %v247
    %v345 = vpack.c.b16 %v250, %v249
    %v346 = vpack.c.b16 %v252, %v251
    %v347 = vpack.c.b16 %v254, %v253
    %v348 = vpack.c.b16 %v256, %v255
    %v349 = vpack.c.b16 %v258, %v257
    %v350 = vpack.c.b16 %v260, %v259
    %v351 = vpack.c.b16 %v262, %v261
    %v352 = vpack.c.b16 %v264, %v263
    %v353 = vpack.c.b16 %v266, %v265
    %v354 = vpack.c.b16 %v268, %v267
    %v355 = vpack.c.b16 %v270, %v269
    %v356 = vpack.c.b16 %v272, %v271
    %v357 = vpack.c.b16 %v274, %v273
    %v358 = vpack.c.b16 %v276, %v275
    %v359 = vpack.c.b16 %v278, %v277
    %v360 = vpack.c.b16 %v280, %v279
    %v361 = vpack.c.b16 %v282, %v281
    %v362 = vpack.c.b16 %v284, %v283
    %v363 = vpack.c.b16 %v286, %v285
    %v364 = vpack.c.b16 %v288, %v287
    %v365 = vpack.c.b16 %v290, %v289
    %v366 = vpack.c.b16 %v292, %v291
    %v367 = vpack.c.b16 %v294, %v293
    %v368 = vpack.c.b16 %v296, %v295
    %v369 = vpack.c.b16 %v298, %v297
    %v370 = vpack.c.b16 %v300, %v299
    %v371 = vpack.c.b16 %v302, %v301
    %v372 = vpack.c.b16 %v304, %v303
    %v373 = vpack.c.b16 %v306, %v305
    %v374 = vpack.c.b16 %v308, %v307
    %v375 = vpack.c.b16 %v310, %v309
    %v376 = vpack.c.b16 %v312, %v311
    %v377 = vpack.c.b16 %v314, %v313
    %v378 = vpack.c.b16 %v316, %v315
    %v379 = vpack.c.b16 %v318, %v317
    %v380 = vpack.c.b16 %v320, %v319
    %v381 = vpack.c.b16 %v322, %v321
    %v382 = vpack.c.b16 %v324, %v323
    %v383 = vpack.c.b16 %v326, %v325
    %v384 = vpack.c.b16 %v328, %v327
    %v385 = vpack.c.b16 %v330, %v329
    %v386 = vpack.c.b16 %v332, %v331
    %v387 = vpack.c.b16 %v334, %v333
    %v388 = vpack.c.b16 %v336, %v335
    %v389 = vpack.c.b16 %v338, %v337
    %v390 = vpack.c.b16 %v340, %v339
    %v391 = vpack.c.b16 %v342, %v341
    %vm441 = vcmask 130048
    %v443 = vsel %vm441, %v41, 0
    %445 = vmatprep.subr.bf16.mxu0 0
    %446 = vmatpush1.bf16.msra.mxu0 %v343
    %447 = vmatprep.subr.bf16.mxu0 0
    %448 = vmatpush1.bf16.msra.mxu0 %v344
    %449 = vmatprep.subr.bf16.mxu0 0
    %450 = vmatpush1.bf16.msra.mxu0 %v345
    %451 = vmatprep.subr.bf16.mxu0 0
    %452 = vmatpush1.bf16.msra.mxu0 %v346
    %453 = vmatprep.subr.bf16.mxu0 0
    %454 = vmatpush1.bf16.msra.mxu0 %v347
    %455 = vmatprep.subr.bf16.mxu0 0
    %456 = vmatpush1.bf16.msra.mxu0 %v348
    %457 = vmatprep.subr.bf16.mxu0 0
    %458 = vmatpush1.bf16.msra.mxu0 %v349
    %459 = vmatprep.subr.bf16.mxu0 0
    %460 = vmatpush1.bf16.msra.mxu0 %v350
    %461 = vmatprep.subr.bf16.mxu0 0
    %462 = vmatpush1.bf16.msra.mxu0 %v351
    %463 = vmatprep.subr.bf16.mxu0 0
    %464 = vmatpush1.bf16.msra.mxu0 %v352
    %465 = vmatprep.subr.bf16.mxu0 0
    %466 = vmatpush1.bf16.msra.mxu0 %v353
    %467 = vmatprep.subr.bf16.mxu0 0
    %468 = vmatpush1.bf16.msra.mxu0 %v354
    %469 = vmatprep.subr.bf16.mxu0 0
    %470 = vmatpush1.bf16.msra.mxu0 %v355
    %471 = vmatprep.subr.bf16.mxu0 0
    %472 = vmatpush1.bf16.msra.mxu0 %v356
    %473 = vmatprep.subr.bf16.mxu0 0
    %474 = vmatpush1.bf16.msra.mxu0 %v357
    %475 = vmatprep.subr.bf16.mxu0 0
    %476 = vmatpush1.bf16.msra.mxu0 %v358
    %477 = vmatprep.mubr.bf16.mxu0 %v36
    %478 = vmatmul.mubr.bf16.gmra.mrb[0].mxu0 %v35
    %v479 = vpop.f32.mrb[0].mxu0
    %v480 = vadd.f32 %v145, %v479
    %v481 = vpop.f32.mrb[0].mxu0
    %v482 = vpop.f32.mrb[0].mxu0
    %v483 = vpop.f32.mrb[0].mxu0
    %484 = vdwg.mxu0
    %485 = vmatprep.subr.bf16.mxu0 0
    %486 = vmatpush1.bf16.msra.mxu0 %v359
    %487 = vmatprep.subr.bf16.mxu0 0
    %488 = vmatpush1.bf16.msra.mxu0 %v360
    %489 = vmatprep.subr.bf16.mxu0 0
    %490 = vmatpush1.bf16.msra.mxu0 %v361
    %491 = vmatprep.subr.bf16.mxu0 0
    %492 = vmatpush1.bf16.msra.mxu0 %v362
    %493 = vmatprep.subr.bf16.mxu0 0
    %494 = vmatpush1.bf16.msra.mxu0 %v363
    %495 = vmatprep.subr.bf16.mxu0 0
    %496 = vmatpush1.bf16.msra.mxu0 %v364
    %497 = vmatprep.subr.bf16.mxu0 0
    %498 = vmatpush1.bf16.msra.mxu0 %v365
    %499 = vmatprep.subr.bf16.mxu0 0
    %500 = vmatpush1.bf16.msra.mxu0 %v366
    %501 = vmatprep.subr.bf16.mxu0 0
    %502 = vmatpush1.bf16.msra.mxu0 %v367
    %503 = vmatprep.subr.bf16.mxu0 0
    %504 = vmatpush1.bf16.msra.mxu0 %v368
    %505 = vmatprep.subr.bf16.mxu0 0
    %506 = vmatpush1.bf16.msra.mxu0 %v369
    %507 = vmatprep.subr.bf16.mxu0 0
    %508 = vmatpush1.bf16.msra.mxu0 %v370
    %509 = vmatprep.subr.bf16.mxu0 0
    %510 = vmatpush1.bf16.msra.mxu0 %v371
    %511 = vmatprep.subr.bf16.mxu0 0
    %512 = vmatpush1.bf16.msra.mxu0 %v372
    %513 = vmatprep.subr.bf16.mxu0 0
    %514 = vmatpush1.bf16.msra.mxu0 %v373
    %515 = vmatprep.subr.bf16.mxu0 0
    %516 = vmatpush1.bf16.msra.mxu0 %v374
    %517 = vmatprep.mubr.bf16.mxu0 %v38
    %518 = vmatmul.mubr.bf16.gmra.mrb[0].mxu0 %v37
    %v519 = vpop.f32.mrb[0].mxu0
    %v520 = vadd.f32 %v480, %v519
    %v521 = vpop.f32.mrb[0].mxu0
    %v522 = vpop.f32.mrb[0].mxu0
    %v523 = vpop.f32.mrb[0].mxu0
    %524 = vdwg.mxu0
    %525 = vmatprep.subr.bf16.mxu0 0
    %526 = vmatpush1.bf16.msra.mxu0 %v375
    %527 = vmatprep.subr.bf16.mxu0 0
    %528 = vmatpush1.bf16.msra.mxu0 %v376
    %529 = vmatprep.subr.bf16.mxu0 0
    %530 = vmatpush1.bf16.msra.mxu0 %v377
    %531 = vmatprep.subr.bf16.mxu0 0
    %532 = vmatpush1.bf16.msra.mxu0 %v378
    %533 = vmatprep.subr.bf16.mxu0 0
    %534 = vmatpush1.bf16.msra.mxu0 %v379
    %535 = vmatprep.subr.bf16.mxu0 0
    %536 = vmatpush1.bf16.msra.mxu0 %v380
    %537 = vmatprep.subr.bf16.mxu0 0
    %538 = vmatpush1.bf16.msra.mxu0 %v381
    %539 = vmatprep.subr.bf16.mxu0 0
    %540 = vmatpush1.bf16.msra.mxu0 %v382
    %541 = vmatprep.subr.bf16.mxu0 0
    %542 = vmatpush1.bf16.msra.mxu0 %v383
    %543 = vmatprep.subr.bf16.mxu0 0
    %544 = vmatpush1.bf16.msra.mxu0 %v384
    %545 = vmatprep.subr.bf16.mxu0 0
    %546 = vmatpush1.bf16.msra.mxu0 %v385
    %547 = vmatprep.subr.bf16.mxu0 0
    %548 = vmatpush1.bf16.msra.mxu0 %v386
    %549 = vmatprep.subr.bf16.mxu0 0
    %550 = vmatpush1.bf16.msra.mxu0 %v387
    %551 = vmatprep.subr.bf16.mxu0 0
    %552 = vmatpush1.bf16.msra.mxu0 %v388
    %553 = vmatprep.subr.bf16.mxu0 0
    %554 = vmatpush1.bf16.msra.mxu0 %v389
    %555 = vmatprep.subr.bf16.mxu0 0
    %556 = vmatpush1.bf16.msra.mxu0 %v390
    %557 = vmatprep.mubr.bf16.mxu0 %v40
    %558 = vmatmul.mubr.bf16.gmra.mrb[0].mxu0 %v39
    %v559 = vpop.f32.mrb[0].mxu0
    %v560 = vadd.f32 %v520, %v559
    %v561 = vpop.f32.mrb[0].mxu0
    %v562 = vpop.f32.mrb[0].mxu0
    %v563 = vpop.f32.mrb[0].mxu0
    %564 = vdwg.mxu0
    %565 = vmatprep.subr.bf16.mxu0 0
    %566 = vmatpush1.bf16.msra.mxu0 %v391
    %567 = vmatprep.subr.bf16.mxu0 0
    %568 = vmatpush1.bf16.msra.mxu0 0
    %569 = vmatprep.subr.bf16.mxu0 0
    %570 = vmatpush1.bf16.msra.mxu0 0
    %571 = vmatprep.subr.bf16.mxu0 0
    %572 = vmatpush1.bf16.msra.mxu0 0
    %573 = vmatprep.subr.bf16.mxu0 0
    %574 = vmatpush1.bf16.msra.mxu0 0
    %575 = vmatprep.subr.bf16.mxu0 0
    %576 = vmatpush1.bf16.msra.mxu0 0
    %577 = vmatprep.subr.bf16.mxu0 0
    %578 = vmatpush1.bf16.msra.mxu0 0
    %579 = vmatprep.subr.bf16.mxu0 0
    %580 = vmatpush1.bf16.msra.mxu0 0
    %581 = vmatprep.subr.bf16.mxu0 0
    %582 = vmatpush1.bf16.msra.mxu0 0
    %583 = vmatprep.subr.bf16.mxu0 0
    %584 = vmatpush1.bf16.msra.mxu0 0
    %585 = vmatprep.subr.bf16.mxu0 0
    %586 = vmatpush1.bf16.msra.mxu0 0
    %587 = vmatprep.subr.bf16.mxu0 0
    %588 = vmatpush1.bf16.msra.mxu0 0
    %589 = vmatprep.subr.bf16.mxu0 0
    %590 = vmatpush1.bf16.msra.mxu0 0
    %591 = vmatprep.subr.bf16.mxu0 0
    %592 = vmatpush1.bf16.msra.mxu0 0
    %593 = vmatprep.subr.bf16.mxu0 0
    %594 = vmatpush1.bf16.msra.mxu0 0
    %595 = vmatprep.subr.bf16.mxu0 0
    %596 = vmatpush1.bf16.msra.mxu0 0
    %597 = vmatprep.mubr.bf16.mxu0 0
    %598 = vmatmul.mubr.bf16.gmra.mrb[0].mxu0 %v443
    %v599 = vpop.f32.mrb[0].mxu0
    %v600 = vadd.f32 %v560, %v599
    %v601 = vpop.f32.mrb[0].mxu0
    %v602 = vpop.f32.mrb[0].mxu0
    %v603 = vpop.f32.mrb[0].mxu0
    %604 = vdwg.mxu0
    %v605 = vxor.u32 %v600, 2147483648
    %v606 = vmul.f32 %v605, 1.442695
    %v607 = vpow.pop %v606
    %v608 = vadd.f32 %v607, 1.0
    %v609 = vrcp.pop %v608
    %v610 = vmul.f32 1.0, %v609
    %v611 = vpack.c.bf16 %v610, %v610
    %v612 = vld [vmem:[%s3] sm:$0xf]
    %v613 = vld [vmem:[%s3 + $0x4] sm:$0xf]
    %v614 = vld [vmem:[%s3 + $0x8] sm:$0xf]
    %v615 = vld [vmem:[%s3 + $0xc] sm:$0xf]
    %v616 = vld [vmem:[%s3 + $0x10] sm:$0xf]
    %v617 = vld [vmem:[%s3 + $0x14] sm:$0xf]
    %v618 = vld [vmem:[%s3 + $0x18] sm:$0xf]
    %v619 = vld [vmem:[%s3 + $0x1c] sm:$0xf]
    %v620 = vld [vmem:[%s3 + $0x20] sm:$0xf]
    %v621 = vld [vmem:[%s3 + $0x24] sm:$0xf]
    %v622 = vld [vmem:[%s3 + $0x28] sm:$0xf]
    %v623 = vld [vmem:[%s3 + $0x2c] sm:$0xf]
    %v624 = vld [vmem:[%s3 + $0x30] sm:$0xf]
    %v625 = vld [vmem:[%s3 + $0x34] sm:$0xf]
    %v626 = vld [vmem:[%s3 + $0x38] sm:$0xf]
    %v627 = vld [vmem:[%s3 + $0x3c] sm:$0xf]
    %v628 = vld [vmem:[%s4] sm:$0x1]
    %v630 = vlaneseq
    %v631 = vshrl.u32 %v630, 7
    %v632 = vsub.s32 0, %v631
    %v633 = vrot.slane %v628, %v632
    %v651 = vunpack.c.l.b16 %v612
    %v652 = vunpack.c.l.b16 %v613
    %v653 = vunpack.c.l.b16 %v614
    %v654 = vunpack.c.l.b16 %v615
    %v655 = vunpack.c.l.b16 %v616
    %v656 = vunpack.c.l.b16 %v617
    %v657 = vunpack.c.l.b16 %v618
    %v658 = vunpack.c.l.b16 %v619
    %v659 = vunpack.c.l.b16 %v620
    %v660 = vunpack.c.l.b16 %v621
    %v661 = vunpack.c.l.b16 %v622
    %v662 = vunpack.c.l.b16 %v623
    %v663 = vunpack.c.l.b16 %v624
    %v664 = vunpack.c.l.b16 %v625
    %v665 = vunpack.c.l.b16 %v626
    %v666 = vunpack.c.l.b16 %v627
    %v667 = vpack.c.b16 %v652, %v651
    %v668 = vpack.c.b16 %v654, %v653
    %v669 = vpack.c.b16 %v656, %v655
    %v670 = vpack.c.b16 %v658, %v657
    %v671 = vpack.c.b16 %v660, %v659
    %v672 = vpack.c.b16 %v662, %v661
    %v673 = vpack.c.b16 %v664, %v663
    %v674 = vpack.c.b16 %v666, %v665
    %683 = vmatprep.subr.bf16.mxu0 0
    %684 = vmatpush1.bf16.msra.mxu0 %v667
    %685 = vmatprep.subr.bf16.mxu0 0
    %686 = vmatpush1.bf16.msra.mxu0 %v668
    %687 = vmatprep.subr.bf16.mxu0 0
    %688 = vmatpush1.bf16.msra.mxu0 %v669
    %689 = vmatprep.subr.bf16.mxu0 0
    %690 = vmatpush1.bf16.msra.mxu0 %v670
    %691 = vmatprep.subr.bf16.mxu0 0
    %692 = vmatpush1.bf16.msra.mxu0 %v671
    %693 = vmatprep.subr.bf16.mxu0 0
    %694 = vmatpush1.bf16.msra.mxu0 %v672
    %695 = vmatprep.subr.bf16.mxu0 0
    %696 = vmatpush1.bf16.msra.mxu0 %v673
    %697 = vmatprep.subr.bf16.mxu0 0
    %698 = vmatpush1.bf16.msra.mxu0 %v674
    %699 = vmatprep.subr.bf16.mxu0 0
    %700 = vmatpush1.bf16.msra.mxu0 0
    %701 = vmatprep.subr.bf16.mxu0 0
    %702 = vmatpush1.bf16.msra.mxu0 0
    %703 = vmatprep.subr.bf16.mxu0 0
    %704 = vmatpush1.bf16.msra.mxu0 0
    %705 = vmatprep.subr.bf16.mxu0 0
    %706 = vmatpush1.bf16.msra.mxu0 0
    %707 = vmatprep.subr.bf16.mxu0 0
    %708 = vmatpush1.bf16.msra.mxu0 0
    %709 = vmatprep.subr.bf16.mxu0 0
    %710 = vmatpush1.bf16.msra.mxu0 0
    %711 = vmatprep.subr.bf16.mxu0 0
    %712 = vmatpush1.bf16.msra.mxu0 0
    %713 = vmatprep.subr.bf16.mxu0 0
    %714 = vmatpush1.bf16.msra.mxu0 0
    %715 = vmatprep.mubr.bf16.mxu0 0
    %716 = vmatmul.mubr.bf16.gmra.mrb[0].mxu0 %v611
    %v717 = vpop.f32.mrb[0].mxu0
    %v718 = vadd.f32 %v633, %v717
    %v719 = vpop.f32.mrb[0].mxu0
    %v720 = vpop.f32.mrb[0].mxu0
    %v721 = vpop.f32.mrb[0].mxu0
    %722 = vdwg.mxu0
    %v723 = vxor.u32 %v718, 2147483648
    %v724 = vmul.f32 %v723, 1.442695
    %v725 = vpow.pop %v724
    %v726 = vadd.f32 %v725, 1.0
    %v727 = vrcp.pop %v726
    %v728 = vmul.f32 1.0, %v727
    %v729 = vpack.c.bf16 %v728, %v728
    %v730 = vld [vmem:[%s5] sm:$0xf]
    %v731 = vld [vmem:[%s5 + $0x4] sm:$0xf]
    %v732 = vld [vmem:[%s5 + $0x8] sm:$0xf]
    %v733 = vld [vmem:[%s5 + $0xc] sm:$0xf]
    %v734 = vld [vmem:[%s5 + $0x10] sm:$0xf]
    %v735 = vld [vmem:[%s5 + $0x14] sm:$0xf]
    %v736 = vld [vmem:[%s5 + $0x18] sm:$0xf]
    %v737 = vld [vmem:[%s5 + $0x1c] sm:$0xf]
    %v738 = vld [vmem:[%s6] sm:$0x1]
    %v740 = vlaneseq
    %v741 = vshrl.u32 %v740, 7
    %v742 = vsub.s32 0, %v741
    %v743 = vrot.slane %v738, %v742
    %v753 = vunpack.c.l.b16 %v730
    %v754 = vunpack.c.l.b16 %v731
    %v755 = vunpack.c.l.b16 %v732
    %v756 = vunpack.c.l.b16 %v733
    %v757 = vunpack.c.l.b16 %v734
    %v758 = vunpack.c.l.b16 %v735
    %v759 = vunpack.c.l.b16 %v736
    %v760 = vunpack.c.l.b16 %v737
    %v761 = vpack.c.b16 %v754, %v753
    %v762 = vpack.c.b16 %v756, %v755
    %v763 = vpack.c.b16 %v758, %v757
    %v764 = vpack.c.b16 %v760, %v759
    %vm769 = vcmask 523264
    %v771 = vsel %vm769, %v729, 0
    %773 = vmatprep.subr.bf16.mxu0 0
    %774 = vmatpush1.bf16.msra.mxu0 %v761
    %775 = vmatprep.subr.bf16.mxu0 0
    %776 = vmatpush1.bf16.msra.mxu0 %v762
    %777 = vmatprep.subr.bf16.mxu0 0
    %778 = vmatpush1.bf16.msra.mxu0 %v763
    %779 = vmatprep.subr.bf16.mxu0 0
    %780 = vmatpush1.bf16.msra.mxu0 %v764
    %781 = vmatprep.subr.bf16.mxu0 0
    %782 = vmatpush1.bf16.msra.mxu0 0
    %783 = vmatprep.subr.bf16.mxu0 0
    %784 = vmatpush1.bf16.msra.mxu0 0
    %785 = vmatprep.subr.bf16.mxu0 0
    %786 = vmatpush1.bf16.msra.mxu0 0
    %787 = vmatprep.subr.bf16.mxu0 0
    %788 = vmatpush1.bf16.msra.mxu0 0
    %789 = vmatprep.subr.bf16.mxu0 0
    %790 = vmatpush1.bf16.msra.mxu0 0
    %791 = vmatprep.subr.bf16.mxu0 0
    %792 = vmatpush1.bf16.msra.mxu0 0
    %793 = vmatprep.subr.bf16.mxu0 0
    %794 = vmatpush1.bf16.msra.mxu0 0
    %795 = vmatprep.subr.bf16.mxu0 0
    %796 = vmatpush1.bf16.msra.mxu0 0
    %797 = vmatprep.subr.bf16.mxu0 0
    %798 = vmatpush1.bf16.msra.mxu0 0
    %799 = vmatprep.subr.bf16.mxu0 0
    %800 = vmatpush1.bf16.msra.mxu0 0
    %801 = vmatprep.subr.bf16.mxu0 0
    %802 = vmatpush1.bf16.msra.mxu0 0
    %803 = vmatprep.subr.bf16.mxu0 0
    %804 = vmatpush1.bf16.msra.mxu0 0
    %805 = vmatprep.mubr.bf16.mxu0 0
    %806 = vmatmul.mubr.bf16.gmra.mrb[0].mxu0 %v771
    %v807 = vpop.f32.mrb[0].mxu0
    %v808 = vadd.f32 %v743, %v807
    %v809 = vpop.f32.mrb[0].mxu0
    %v810 = vpop.f32.mrb[0].mxu0
    %v811 = vpop.f32.mrb[0].mxu0
    %812 = vdwg.mxu0
    %813 = vmax.xlane.f32.xlu0 %v808
    %v814 = vpop.xlane.xlu0 %813
    %v815 = vsub.f32 %v808, %v814
    %v816 = vmul.f32 %v815, 1.442695
    %v817 = vpow.pop %v816
    %818 = vadd.xlane.f32.xlu0 %v817
    %v819 = vpop.xlane.xlu0 %818
    %v820 = vlog2.pop %v819
    %v821 = vmul.f32 %v820, 0.6931472
    %v822 = vsub.f32 %v815, %v821
    %823 = vst [vmem:[#allocation2] sm:$0xff] %v822
    // Predicated region
    $region30: #{mnist_fc_forward.1} parent=1 // pred_check
      _
    $region31: #{mnist_fc_forward.1} parent=1 // pred_check_branch
      %825 = sbr.rel (0) target = $region33
    $region32: #{mnist_fc_forward.1} parent=1 // pred_region
      %s827 = ssub.s32 128, 128
      %828 = vsyncadd [#allocation3], %s827
      %s830 = sshll.u32 [#allocation2], 4
      %s831 = int_to_ptr.vmem [resolvable:$true] %s830
      %833 = dma.vmem_to_hbm [thread:$0]  %s831, 128, %s7, [#allocation3]
    $region33: #{mnist_fc_forward.1} parent=1 // pred_fallthru
      _
    // Predicated region
    $region34: #{mnist_fc_forward.1} parent=1 // pred_check
      _
    $region35: #{mnist_fc_forward.1} parent=1 // pred_check_branch
      %835 = sbr.rel (0) target = $region37
    $region36: #{mnist_fc_forward.1} parent=1 // pred_region
      %836 = dma.done [#allocation3], 128
    $region37: #{mnist_fc_forward.1} parent=1 // pred_fallthru
      _
    %837 = vsyncpa [#allocation3], 1

</llo_original>
